<compile_context>
chip_gen: v7x
topology: tpu7x:2x2x1
jax: 0.10.0
libtpu: 0.0.40
codegen_flags: <defaults>
</compile_context>

<pallas_src>
import functools
import math

import jax
import jax.numpy as jnp
from jax.experimental import pallas as pl
from jax.experimental.pallas import tpu as pltpu

# Synthetic stand-in for the faster-rcnn cfg object.
CFG = {
    "TRAIN": {"RPN_PRE_NMS_TOP": 128, "RPN_POST_NMS_TOP": 32, "RPN_NMS_THRESHOLD": 0.7},
    "TEST": {"RPN_PRE_NMS_TOP": 128, "RPN_POST_NMS_TOP": 32, "RPN_NMS_THRESHOLD": 0.7},
}

# Detectron-style clamp so exp(dw/dh) cannot overflow to inf and poison NMS.
BBOX_XFORM_CLIP = math.log(1000.0 / 16.0)


# ----------------------------------------------------------------------------
# Anchor generation (deterministic stand-in for lib/model/rpn `generate(...)`)
# ----------------------------------------------------------------------------
def _generate_anchors(feat_h, feat_w, anchors_per_point, feat_stride=16.0, base_size=16.0):
    a = anchors_per_point
    scales = 2.0 ** jnp.arange(a, dtype=jnp.float32)  # 1, 2, 4, 8, ...
    ctr = (base_size - 1.0) / 2.0
    ws = base_size * scales
    hs = base_size * scales
    base = jnp.stack(
        [ctr - 0.5 * (ws - 1.0), ctr - 0.5 * (hs - 1.0),
         ctr + 0.5 * (ws - 1.0), ctr + 0.5 * (hs - 1.0)],
        axis=1,
    )  # (A, 4)
    sx = jnp.arange(feat_w, dtype=jnp.float32) * feat_stride
    sy = jnp.arange(feat_h, dtype=jnp.float32) * feat_stride
    gx, gy = jnp.meshgrid(sx, sy)  # (H, W) -- y-major, matches NHWC flatten order
    shifts = jnp.stack([gx.ravel(), gy.ravel(), gx.ravel(), gy.ravel()], axis=1)  # (H*W, 4)
    anchors = (shifts[:, None, :] + base[None, :, :]).reshape(-1, 4)  # (H*W*A, 4)
    return anchors.astype(jnp.float32)


# ----------------------------------------------------------------------------
# Pallas kernel 1: bbox_transform_inv + clip_boxes
#   im_ref  : (B, 2) SMEM scalars [im_h, im_w] per image (whole array)
#   anc_ref : (4, nrt, 128) VMEM  (shared across batch; DMA'd once per chunk)
#   dlt_ref : (4, nrt, 128) VMEM
#   out_ref : (4, nrt, 128) VMEM
# ----------------------------------------------------------------------------
def _decode_clip_kernel(im_ref, anc_ref, dlt_ref, out_ref):
    bi = pl.program_id(1)  # grid = (chunk, batch), batch innermost
    im_h = im_ref[bi, 0]
    im_w = im_ref[bi, 1]
    max_x = im_w - 1.0
    max_y = im_h - 1.0

    ax1, ay1, ax2, ay2 = anc_ref[0], anc_ref[1], anc_ref[2], anc_ref[3]
    widths = ax2 - ax1 + 1.0
    heights = ay2 - ay1 + 1.0
    ctr_x = ax1 + 0.5 * widths
    ctr_y = ay1 + 0.5 * heights

    dx, dy = dlt_ref[0], dlt_ref[1]
    dw = jnp.minimum(dlt_ref[2], BBOX_XFORM_CLIP)
    dh = jnp.minimum(dlt_ref[3], BBOX_XFORM_CLIP)

    pred_ctr_x = dx * widths + ctr_x
    pred_ctr_y = dy * heights + ctr_y
    pred_w = jnp.exp(dw) * widths
    pred_h = jnp.exp(dh) * heights

    def clip(v, hi):
        return jnp.minimum(jnp.maximum(v, 0.0), hi)

    out_ref[0] = clip(pred_ctr_x - 0.5 * pred_w, max_x)
    out_ref[1] = clip(pred_ctr_y - 0.5 * pred_h, max_y)
    out_ref[2] = clip(pred_ctr_x + 0.5 * pred_w, max_x)
    out_ref[3] = clip(pred_ctr_y + 0.5 * pred_h, max_y)


def _decode_and_clip(anchors_4, deltas_4, im_vals, nrt):
    b, _, nr, _ = deltas_4.shape
    nc = nr // nrt
    return pl.pallas_call(
        _decode_clip_kernel,
        out_shape=jax.ShapeDtypeStruct((b, 4, nr, 128), jnp.float32),
        grid=(nc, b),  # chunk outer, batch inner -> anchor tile DMA reused across batch
        in_specs=[
            pl.BlockSpec(memory_space=pltpu.MemorySpace.SMEM),
            pl.BlockSpec((4, nrt, 128), lambda ci, bi: (0, ci, 0)),
            pl.BlockSpec((None, 4, nrt, 128), lambda ci, bi: (bi, 0, ci, 0)),
        ],
        out_specs=pl.BlockSpec((None, 4, nrt, 128), lambda ci, bi: (bi, 0, ci, 0)),
        compiler_params=pltpu.CompilerParams(
            dimension_semantics=("parallel", "parallel")),
    )(im_vals, anchors_4, deltas_4)


# ----------------------------------------------------------------------------
# Pallas kernel 2: blocked exact greedy NMS over score-sorted boxes.
#   boxes_r_ref : (4, nc, 128)  chunk-major, lane-dense (lane = box index)
#   boxes_c_ref : (Npre_pad, 4) row-major (for column views of strip boxes)
#   keep_ref    : (nc, 128)     1.0 = kept, 0.0 = suppressed
#   diag_ref    : (128, 128) f32 VMEM scratch (one strip's own IoU block)
# ----------------------------------------------------------------------------
def _nms_kernel(boxes_r_ref, boxes_c_ref, keep_ref, diag_ref, *, nc, thresh):
    f32 = jnp.float32
    t = thresh

    sub = jax.lax.broadcasted_iota(jnp.int32, (128, 128), 0)
    lane = jax.lax.broadcasted_iota(jnp.int32, (128, 128), 1)
    upper_tri = lane > sub                                   # strict upper triangle
    lane_row = jax.lax.broadcasted_iota(jnp.int32, (1, 128), 1)

    keep_ref[...] = jnp.ones_like(keep_ref)

    def overlap_block(strip_boxes, c):
        # strip_boxes: (128, 4) coords of the suppressor boxes (rows i)
        # chunk c    : the 128 candidate-suppressed boxes (cols j)
        x1i = strip_boxes[:, 0:1]
        y1i = strip_boxes[:, 1:2]
        x2i = strip_boxes[:, 2:3]
        y2i = strip_boxes[:, 3:4]
        cols = boxes_r_ref[:, pl.ds(c, 1), :]                # (4, 1, 128)
        x1j, y1j, x2j, y2j = cols[0], cols[1], cols[2], cols[3]
        area_i = (x2i - x1i + 1.0) * (y2i - y1i + 1.0)       # (128, 1)
        area_j = (x2j - x1j + 1.0) * (y2j - y1j + 1.0)       # (1, 128)
        iw = jnp.maximum(jnp.minimum(x2i, x2j) - jnp.maximum(x1i, x1j) + 1.0, 0.0)
        ih = jnp.maximum(jnp.minimum(y2i, y2j) - jnp.maximum(y1i, y1j) + 1.0, 0.0)
        inter = iw * ih                                      # (128, 128)
        # division-free "IoU > thresh"
        return inter * (1.0 + t) > t * (area_i + area_j)     # bool (128, 128)

    def strip_body(s, carry):
        base = pl.multiple_of(s * 128, 128)
        strip_boxes = boxes_c_ref[pl.ds(base, 128), :]       # (128, 4)

        # (1) strip's own IoU block, strict-upper-triangle masked.
        diag_ref[...] = jnp.where(
            jnp.logical_and(overlap_block(strip_boxes, s), upper_tri), 1.0, 0.0)

        # (2) exact sequential greedy pass inside the strip (1 vreg of state;
        #     keep[i] extraction touches a single vreg regardless of Npre).
        def inner(r, ks):
            keep_r = jnp.sum(ks * (lane_row == r).astype(f32))
            row = diag_ref[pl.ds(r, 1), :]                   # (1, 128)
            return ks * (1.0 - keep_r * row)

        ks = jax.lax.fori_loop(0, 128, inner, keep_ref[pl.ds(s, 1), :], unroll=8)
        keep_ref[pl.ds(s, 1), :] = ks

        # (3) suppress every later 128-chunk with one (1,128)x(128,128) MXU matvec,
        #     building the cross block on the fly (no Npre^2 scratch).
        def chunk_body(c, _):
            blk = overlap_block(strip_boxes, c).astype(f32)  # (128, 128)
            hits = jnp.dot(ks, blk, preferred_element_type=f32)  # (1, 128)
            cur = keep_ref[pl.ds(c, 1), :]
            keep_ref[pl.ds(c, 1), :] = jnp.where(hits > 0.5, 0.0, cur)
            return 0

        jax.lax.fori_loop(s + 1, nc, chunk_body, 0)
        return carry

    jax.lax.fori_loop(0, nc, strip_body, 0)


def _nms(boxes_r, boxes_c, thresh):
    b, _, nc, _ = boxes_r.shape
    npre_pad = nc * 128
    # TODO(synk): when B == 1 on v7x the single grid step uses one TensorCore only;
    # an extra 'parallel' strip axis would engage the second core.
    keep = pl.pallas_call(
        functools.partial(_nms_kernel, nc=nc, thresh=float(thresh)),
        out_shape=jax.ShapeDtypeStruct((b, nc, 128), jnp.float32),
        grid=(b,),
        in_specs=[
            pl.BlockSpec((None, 4, nc, 128), lambda i: (i, 0, 0, 0)),
            pl.BlockSpec((None, npre_pad, 4), lambda i: (i, 0, 0)),
        ],
        out_specs=pl.BlockSpec((None, nc, 128), lambda i: (i, 0, 0)),
        scratch_shapes=[pltpu.VMEM((128, 128), jnp.float32)],
        compiler_params=pltpu.CompilerParams(dimension_semantics=("parallel",)),
    )(boxes_r, boxes_c)
    return keep.reshape(b, npre_pad)


# ----------------------------------------------------------------------------
# Wrapper reproducing _ProposalLayer.forward
# ----------------------------------------------------------------------------
def proposal_layer(inputs, anchors_per_point, feat_stride=16.0):
    scores_map, bbox_deltas, im_info, cfg_key = inputs
    cfg = CFG[cfg_key]
    pre_nms_top = cfg["RPN_PRE_NMS_TOP"]
    post_nms_top = cfg["RPN_POST_NMS_TOP"]
    nms_thresh = cfg["RPN_NMS_THRESHOLD"]

    a = anchors_per_point
    b = bbox_deltas.shape[0]
    fg_scores = scores_map[:, a:, :, :]                       # (B, A, H, W)
    hf, wf = fg_scores.shape[2], fg_scores.shape[3]
    n = hf * wf * a

    # ---- coordinate-major (B, 4, N); N ordering (h, w, a) matches the reference
    # permute(0,2,3,1).view(B,-1,4).  TODO(synk): this NCHW permute stays in XLA;
    # folding it into the decode BlockSpec would save one HBM round trip.
    deltas_cm = jnp.transpose(
        bbox_deltas.reshape(b, a, 4, hf, wf), (0, 2, 3, 4, 1)
    ).reshape(b, 4, n).astype(jnp.float32)
    scores = jnp.transpose(fg_scores, (0, 2, 3, 1)).reshape(b, n).astype(jnp.float32)
    anchors_cm = jnp.transpose(_generate_anchors(hf, wf, a, feat_stride), (1, 0))  # (4, N)

    # ---- adaptive decode tile: biggest (rows x 128) tile with <= ~25% pad waste ----
    nrt = 8
    for cand in (256, 128, 64, 32, 16):
        if n >= 4 * cand * 128:
            nrt = cand
            break
    tile = nrt * 128
    n_pad = ((n + tile - 1) // tile) * tile
    pad = n_pad - n
    if pad:
        anchors_cm = jnp.pad(anchors_cm, ((0, 0), (0, pad)))
        deltas_cm = jnp.pad(deltas_cm, ((0, 0), (0, 0), (0, pad)))
        scores = jnp.pad(scores, ((0, 0), (0, pad)), constant_values=-1e30)
    nr = n_pad // 128

    anchors_4 = anchors_cm.reshape(4, nr, 128)                 # shared across batch
    deltas_4 = deltas_cm.reshape(b, 4, nr, 128)
    im_vals = im_info[:, :2].astype(jnp.float32)               # (B, 2) = [im_h, im_w]

    # --- Pallas kernel 1: bbox decode + clip ---
    proposals_cm = _decode_and_clip(anchors_4, deltas_4, im_vals, nrt).reshape(b, 4, n_pad)

    # --- pre-NMS selection: top_k instead of a full argsort ---
    if pre_nms_top > 0 and pre_nms_top < b * n:
        npre = min(pre_nms_top, n)
    else:
        npre = n
    _, order = jax.lax.top_k(scores, npre)                                        # (B, Npre)
    props_sorted = jnp.take_along_axis(proposals_cm, order[:, None, :], axis=2)   # (B,4,Npre)

    # --- pad Npre to a lane-dense multiple of 128 with far-away degenerate boxes ---
    npre_pad = ((npre + 127) // 128) * 128
    if npre_pad > npre:
        props_sorted = jnp.pad(props_sorted, ((0, 0), (0, 0), (0, npre_pad - npre)),
                               constant_values=-1e8)
    boxes_r = props_sorted.reshape(b, 4, npre_pad // 128, 128)
    boxes_c = jnp.transpose(props_sorted, (0, 2, 1))                               # (B,Npre_pad,4)

    # --- Pallas kernel 2: blocked greedy NMS keep mask ---
    # TODO(synk): RPN_MIN_SIZE proposal filter of some _ProposalLayer variants is
    # intentionally not implemented (absent from the reference module).
    keep = _nms(boxes_r, boxes_c, nms_thresh)                                      # (B, Npre_pad)
    keep = keep * (jnp.arange(npre_pad) < npre)[None, :].astype(keep.dtype)

    # --- pack output (B, post_nms_top, 5): col 0 = batch index, cols 1:5 = boxes ---
    k_sel = min(post_nms_top, npre_pad)
    keep_order = jnp.argsort(-keep, axis=1)[:, :k_sel]        # stable: kept (score order) first
    num_keep = jnp.sum(keep, axis=1).astype(jnp.int32)                             # (B,)
    sel = jnp.take_along_axis(props_sorted, keep_order[:, None, :], axis=2)        # (B,4,k_sel)
    valid = (jnp.arange(k_sel)[None, :] < num_keep[:, None]).astype(jnp.float32)
    boxes_out = jnp.transpose(sel, (0, 2, 1)) * valid[:, :, None]                  # (B,k_sel,4)
    if k_sel < post_nms_top:
        boxes_out = jnp.pad(boxes_out, ((0, 0), (0, post_nms_top - k_sel), (0, 0)))
    batch_col = jnp.broadcast_to(
        jnp.arange(b, dtype=jnp.float32)[:, None, None], (b, post_nms_top, 1))
    return jnp.concatenate([batch_col, boxes_out], axis=2)


if __name__ == "__main__":
    key = jax.random.PRNGKey(0)
    B, A, H, W = 2, 4, 8, 8  # N = H*W*A = 256 proposals per image
    k1, k2 = jax.random.split(key)

    rpn_cls_score = jax.random.normal(k1, (B, 2 * A, H, W), dtype=jnp.float32)
    rpn_bbox_pred = jax.random.normal(k2, (B, 4 * A, H, W), dtype=jnp.float32) * 0.5
    im_info = jnp.array([[128.0, 128.0, 1.0]] * B, dtype=jnp.float32)

    out = proposal_layer((rpn_cls_score, rpn_bbox_pred, im_info, "TEST"),
                         anchors_per_point=A)
    out = jax.block_until_ready(out)

    post = CFG["TEST"]["RPN_POST_NMS_TOP"]
    assert out.shape == (B, post, 5)
    assert out.dtype == jnp.float32
    assert bool(jnp.all(jnp.isfinite(out)))
    assert bool(jnp.all(out[:, :, 0] == jnp.arange(B, dtype=jnp.float32)[:, None]))
    assert bool(jnp.all(out[:, :, 1:] >= 0.0)) and bool(jnp.all(out[:, :, 1:] <= 127.0))
    print("KERNEL_OK")
</pallas_src>

<mosaic_0001>
module attributes {stable_mosaic.version = 11 : i64} {
  func.func @_decode_clip_kernel(%arg0: i32, %arg1: i32, %arg2: memref<2x2xf32, #tpu.memory_space<smem>>, %arg3: memref<4x8x128xf32, #tpu.memory_space<vmem>>, %arg4: memref<1x4x8x128xf32, #tpu.memory_space<vmem>>, %arg5: memref<1x4x8x128xf32, #tpu.memory_space<vmem>>) attributes {dimension_semantics = [#tpu.dimension_semantics<parallel>, #tpu.dimension_semantics<parallel>], iteration_bounds = array<i64: 1, 2>, scalar_prefetch = 0 : i64, scratch_operands = 0 : i64, tpu.core_type = #tpu.core_type<tc>, window_params = [{transform_indices = @transform_0, window_bounds = array<i64: 2, 2>}, {transform_indices = @transform_1, window_bounds = array<i64: 4, 8, 128>}, {transform_indices = @transform_2, window_bounds = array<i64: 1, 4, 8, 128>}, {transform_indices = @transform_3, window_bounds = array<i64: 1, 4, 8, 128>}]} {
    %0 = arith.index_cast %arg1 : i32 to index
    %c0 = arith.constant 0 : index
    %1 = memref.load %arg2[%0, %c0] : memref<2x2xf32, #tpu.memory_space<smem>>
    %2 = arith.index_cast %arg1 : i32 to index
    %c1 = arith.constant 1 : index
    %3 = memref.load %arg2[%2, %c1] : memref<2x2xf32, #tpu.memory_space<smem>>
    %cst = arith.constant 1.000000e+00 : f32
    %4 = arith.subf %3, %cst : f32
    %cst_0 = arith.constant 1.000000e+00 : f32
    %5 = arith.subf %1, %cst_0 : f32
    %c0_1 = arith.constant 0 : index
    %c0_2 = arith.constant 0 : index
    %c0_3 = arith.constant 0 : index
    %6 = vector.load %arg3[%c0_1, %c0_2, %c0_3] : memref<4x8x128xf32, #tpu.memory_space<vmem>>, vector<1x8x128xf32>
    %7 = vector.shape_cast %6 : vector<1x8x128xf32> to vector<8x128xf32>
    %c1_4 = arith.constant 1 : index
    %c0_5 = arith.constant 0 : index
    %c0_6 = arith.constant 0 : index
    %8 = vector.load %arg3[%c1_4, %c0_5, %c0_6] : memref<4x8x128xf32, #tpu.memory_space<vmem>>, vector<1x8x128xf32>
    %9 = vector.shape_cast %8 : vector<1x8x128xf32> to vector<8x128xf32>
    %c2 = arith.constant 2 : index
    %c0_7 = arith.constant 0 : index
    %c0_8 = arith.constant 0 : index
    %10 = vector.load %arg3[%c2, %c0_7, %c0_8] : memref<4x8x128xf32, #tpu.memory_space<vmem>>, vector<1x8x128xf32>
    %11 = vector.shape_cast %10 : vector<1x8x128xf32> to vector<8x128xf32>
    %c3 = arith.constant 3 : index
    %c0_9 = arith.constant 0 : index
    %c0_10 = arith.constant 0 : index
    %12 = vector.load %arg3[%c3, %c0_9, %c0_10] : memref<4x8x128xf32, #tpu.memory_space<vmem>>, vector<1x8x128xf32>
    %13 = vector.shape_cast %12 : vector<1x8x128xf32> to vector<8x128xf32>
    %14 = arith.subf %11, %7 : vector<8x128xf32>
    %cst_11 = arith.constant 1.000000e+00 : f32
    %15 = vector.broadcast %cst_11 : f32 to vector<8x128xf32>
    %16 = arith.addf %14, %15 : vector<8x128xf32>
    %17 = arith.subf %13, %9 : vector<8x128xf32>
    %cst_12 = arith.constant 1.000000e+00 : f32
    %18 = vector.broadcast %cst_12 : f32 to vector<8x128xf32>
    %19 = arith.addf %17, %18 : vector<8x128xf32>
    %cst_13 = arith.constant 5.000000e-01 : f32
    %20 = vector.broadcast %cst_13 : f32 to vector<8x128xf32>
    %21 = arith.mulf %20, %16 : vector<8x128xf32>
    %22 = arith.addf %7, %21 : vector<8x128xf32>
    %cst_14 = arith.constant 5.000000e-01 : f32
    %23 = vector.broadcast %cst_14 : f32 to vector<8x128xf32>
    %24 = arith.mulf %23, %19 : vector<8x128xf32>
    %25 = arith.addf %9, %24 : vector<8x128xf32>
    %c0_15 = arith.constant 0 : index
    %c0_16 = arith.constant 0 : index
    %c0_17 = arith.constant 0 : index
    %c0_18 = arith.constant 0 : index
    %26 = vector.load %arg4[%c0_15, %c0_16, %c0_17, %c0_18] : memref<1x4x8x128xf32, #tpu.memory_space<vmem>>, vector<1x1x8x128xf32>
    %27 = vector.shape_cast %26 : vector<1x1x8x128xf32> to vector<8x128xf32>
    %c0_19 = arith.constant 0 : index
    %c1_20 = arith.constant 1 : index
    %c0_21 = arith.constant 0 : index
    %c0_22 = arith.constant 0 : index
    %28 = vector.load %arg4[%c0_19, %c1_20, %c0_21, %c0_22] : memref<1x4x8x128xf32, #tpu.memory_space<vmem>>, vector<1x1x8x128xf32>
    %29 = vector.shape_cast %28 : vector<1x1x8x128xf32> to vector<8x128xf32>
    %c0_23 = arith.constant 0 : index
    %c2_24 = arith.constant 2 : index
    %c0_25 = arith.constant 0 : index
    %c0_26 = arith.constant 0 : index
    %30 = vector.load %arg4[%c0_23, %c2_24, %c0_25, %c0_26] : memref<1x4x8x128xf32, #tpu.memory_space<vmem>>, vector<1x1x8x128xf32>
    %31 = vector.shape_cast %30 : vector<1x1x8x128xf32> to vector<8x128xf32>
    %cst_27 = arith.constant 4.13516665 : f32
    %32 = vector.broadcast %cst_27 : f32 to vector<8x128xf32>
    %33 = arith.minimumf %31, %32 : vector<8x128xf32>
    %c0_28 = arith.constant 0 : index
    %c3_29 = arith.constant 3 : index
    %c0_30 = arith.constant 0 : index
    %c0_31 = arith.constant 0 : index
    %34 = vector.load %arg4[%c0_28, %c3_29, %c0_30, %c0_31] : memref<1x4x8x128xf32, #tpu.memory_space<vmem>>, vector<1x1x8x128xf32>
    %35 = vector.shape_cast %34 : vector<1x1x8x128xf32> to vector<8x128xf32>
    %cst_32 = arith.constant 4.13516665 : f32
    %36 = vector.broadcast %cst_32 : f32 to vector<8x128xf32>
    %37 = arith.minimumf %35, %36 : vector<8x128xf32>
    %38 = arith.mulf %27, %16 : vector<8x128xf32>
    %39 = arith.addf %38, %22 : vector<8x128xf32>
    %40 = arith.mulf %29, %19 : vector<8x128xf32>
    %41 = arith.addf %40, %25 : vector<8x128xf32>
    %42 = math.exp %33 : vector<8x128xf32>
    %43 = arith.mulf %42, %16 : vector<8x128xf32>
    %44 = math.exp %37 : vector<8x128xf32>
    %45 = arith.mulf %44, %19 : vector<8x128xf32>
    %cst_33 = arith.constant 5.000000e-01 : f32
    %46 = vector.broadcast %cst_33 : f32 to vector<8x128xf32>
    %47 = arith.mulf %46, %43 : vector<8x128xf32>
    %48 = arith.subf %39, %47 : vector<8x128xf32>
    %cst_34 = arith.constant 0.000000e+00 : f32
    %49 = vector.broadcast %cst_34 : f32 to vector<8x128xf32>
    %50 = arith.maximumf %48, %49 : vector<8x128xf32>
    %51 = vector.broadcast %4 : f32 to vector<8x128xf32>
    %52 = arith.minimumf %50, %51 : vector<8x128xf32>
    %c0_35 = arith.constant 0 : index
    %c0_36 = arith.constant 0 : index
    %c0_37 = arith.constant 0 : index
    %c0_38 = arith.constant 0 : index
    %53 = vector.load %arg5[%c0_35, %c0_36, %c0_37, %c0_38] : memref<1x4x8x128xf32, #tpu.memory_space<vmem>>, vector<1x1x8x128xf32>
    %54 = vector.shape_cast %53 : vector<1x1x8x128xf32> to vector<8x128xf32>
    %55 = vector.shape_cast %52 : vector<8x128xf32> to vector<1x1x8x128xf32>
    tpu.vector_store %arg5[%c0_35, %c0_36, %c0_37, %c0_38], %55 {strides = array<i32>} : memref<1x4x8x128xf32, #tpu.memory_space<vmem>>, vector<1x1x8x128xf32>,
    %cst_39 = arith.constant 5.000000e-01 : f32
    %56 = vector.broadcast %cst_39 : f32 to vector<8x128xf32>
    %57 = arith.mulf %56, %45 : vector<8x128xf32>
    %58 = arith.subf %41, %57 : vector<8x128xf32>
    %cst_40 = arith.constant 0.000000e+00 : f32
    %59 = vector.broadcast %cst_40 : f32 to vector<8x128xf32>
    %60 = arith.maximumf %58, %59 : vector<8x128xf32>
    %61 = vector.broadcast %5 : f32 to vector<8x128xf32>
    %62 = arith.minimumf %60, %61 : vector<8x128xf32>
    %c0_41 = arith.constant 0 : index
    %c1_42 = arith.constant 1 : index
    %c0_43 = arith.constant 0 : index
    %c0_44 = arith.constant 0 : index
    %63 = vector.load %arg5[%c0_41, %c1_42, %c0_43, %c0_44] : memref<1x4x8x128xf32, #tpu.memory_space<vmem>>, vector<1x1x8x128xf32>
    %64 = vector.shape_cast %63 : vector<1x1x8x128xf32> to vector<8x128xf32>
    %65 = vector.shape_cast %62 : vector<8x128xf32> to vector<1x1x8x128xf32>
    tpu.vector_store %arg5[%c0_41, %c1_42, %c0_43, %c0_44], %65 {strides = array<i32>} : memref<1x4x8x128xf32, #tpu.memory_space<vmem>>, vector<1x1x8x128xf32>,
    %cst_45 = arith.constant 5.000000e-01 : f32
    %66 = vector.broadcast %cst_45 : f32 to vector<8x128xf32>
    %67 = arith.mulf %66, %43 : vector<8x128xf32>
    %68 = arith.addf %39, %67 : vector<8x128xf32>
    %cst_46 = arith.constant 0.000000e+00 : f32
    %69 = vector.broadcast %cst_46 : f32 to vector<8x128xf32>
    %70 = arith.maximumf %68, %69 : vector<8x128xf32>
    %71 = vector.broadcast %4 : f32 to vector<8x128xf32>
    %72 = arith.minimumf %70, %71 : vector<8x128xf32>
    %c0_47 = arith.constant 0 : index
    %c2_48 = arith.constant 2 : index
    %c0_49 = arith.constant 0 : index
    %c0_50 = arith.constant 0 : index
    %73 = vector.load %arg5[%c0_47, %c2_48, %c0_49, %c0_50] : memref<1x4x8x128xf32, #tpu.memory_space<vmem>>, vector<1x1x8x128xf32>
    %74 = vector.shape_cast %73 : vector<1x1x8x128xf32> to vector<8x128xf32>
    %75 = vector.shape_cast %72 : vector<8x128xf32> to vector<1x1x8x128xf32>
    tpu.vector_store %arg5[%c0_47, %c2_48, %c0_49, %c0_50], %75 {strides = array<i32>} : memref<1x4x8x128xf32, #tpu.memory_space<vmem>>, vector<1x1x8x128xf32>,
    %cst_51 = arith.constant 5.000000e-01 : f32
    %76 = vector.broadcast %cst_51 : f32 to vector<8x128xf32>
    %77 = arith.mulf %76, %45 : vector<8x128xf32>
    %78 = arith.addf %41, %77 : vector<8x128xf32>
    %cst_52 = arith.constant 0.000000e+00 : f32
    %79 = vector.broadcast %cst_52 : f32 to vector<8x128xf32>
    %80 = arith.maximumf %78, %79 : vector<8x128xf32>
    %81 = vector.broadcast %5 : f32 to vector<8x128xf32>
    %82 = arith.minimumf %80, %81 : vector<8x128xf32>
    %c0_53 = arith.constant 0 : index
    %c3_54 = arith.constant 3 : index
    %c0_55 = arith.constant 0 : index
    %c0_56 = arith.constant 0 : index
    %83 = vector.load %arg5[%c0_53, %c3_54, %c0_55, %c0_56] : memref<1x4x8x128xf32, #tpu.memory_space<vmem>>, vector<1x1x8x128xf32>
    %84 = vector.shape_cast %83 : vector<1x1x8x128xf32> to vector<8x128xf32>
    %85 = vector.shape_cast %82 : vector<8x128xf32> to vector<1x1x8x128xf32>
    tpu.vector_store %arg5[%c0_53, %c3_54, %c0_55, %c0_56], %85 {strides = array<i32>} : memref<1x4x8x128xf32, #tpu.memory_space<vmem>>, vector<1x1x8x128xf32>,
    return
  }
  func.func @transform_0(%arg0: i32, %arg1: i32) -> (i32, i32) {
    %c0_i32 = arith.constant 0 : i32
    %c0_i32_0 = arith.constant 0 : i32
    %c0_i32_1 = arith.constant 0 : i32
    return %c0_i32, %c0_i32_0 : i32, i32
  }
  func.func @transform_1(%arg0: i32, %arg1: i32) -> (i32, i32, i32) {
    %c0_i32 = arith.constant 0 : i32
    %c0_i32_0 = arith.constant 0 : i32
    %c0_i32_1 = arith.constant 0 : i32
    return %c0_i32, %arg0, %c0_i32_0 : i32, i32, i32
  }
  func.func @transform_2(%arg0: i32, %arg1: i32) -> (i32, i32, i32, i32) {
    %c0_i32 = arith.constant 0 : i32
    %c0_i32_0 = arith.constant 0 : i32
    %c0_i32_1 = arith.constant 0 : i32
    return %arg1, %c0_i32, %arg0, %c0_i32_0 : i32, i32, i32, i32
  }
  func.func @transform_3(%arg0: i32, %arg1: i32) -> (i32, i32, i32, i32) {
    %c0_i32 = arith.constant 0 : i32
    %c0_i32_0 = arith.constant 0 : i32
    %c0_i32_1 = arith.constant 0 : i32
    return %arg1, %c0_i32, %arg0, %c0_i32_0 : i32, i32, i32, i32
  }
}

</mosaic_0001>

<llo_original>
// kernel: tpu_custom_call.1
$region0: #{tpu_custom_call.1}
  #allocation0 [shape = 'u32[]', space=smem, size = 0x4, offset = 0x4, fixed_abs, tag = 'smem constant byte address 0x4 - core index']
  #allocation1 [shape = 'u32[144,128]{1,0:T(1,128)}', space=vmem, size = 0x12000, scoped, tag = 'internal scratch']
  %s0 = inlined_call_operand.hbm [shape: f32[2,2], index: 0, kind: input, shape index: {}]
  %s1 = inlined_call_operand.hbm [shape: f32[4,8,128], index: 1, kind: input, shape index: {}]
  %s2 = inlined_call_operand.hbm [shape: f32[2,4,8,128], index: 2, kind: input, shape index: {}]
  %s3 = inlined_call_operand.hbm [shape: f32[2,4,8,128], index: 3, kind: output, shape index: {}]
  %s4 = sld [smem:[#allocation0]]
  $region57: #{tpu_custom_call.1} parent=0
    _
  %s6 = ssub.s32 1, %s4
  %s7 = scalar_select 0, %s6, %s4
  $region1: #{tpu_custom_call.1} parent=0
    #allocation2 [shape = 'u8[1024]{0}', space=smem, size = 0x400, scoped, tag = 'input window, operand 0, single buffered']
    #allocation3 [shape = 's32[2]{0}', space=sflag, size = 0x8, scoped, tag = 'scoped memory for tpu_custom_call.1']
    #allocation4 [shape = 's32[2]{0}', space=sflag, size = 0x8, scoped, tag = 'scoped memory for tpu_custom_call.1']
    #allocation5 [shape = 's32[2]{0}', space=sflag, size = 0x8, scoped, tag = 'scoped memory for tpu_custom_call.1']
    #allocation6 [shape = 'u8[16384]{0}', space=vmem, size = 0x4000, scoped, tag = 'input window, operand 1, single buffered']
    #allocation7 [shape = 'u8[32768]{0}', space=vmem, size = 0x8000, scoped, tag = 'input window, operand 2']
    #allocation8 [shape = 's32[2]{0}', space=sflag, size = 0x8, scoped, tag = 'scoped memory for tpu_custom_call.1']
    #allocation9 [shape = 'u8[32768]{0}', space=vmem, size = 0x8000, scoped, tag = 'output window, operand 0']
    %8 = vsyncpa [#allocation5], 0
    %9 = vsyncpa [#allocation3], 0
    %10 = vsyncpa [#allocation8], 0
    %s11 = scalar_lea.sflag [#allocation8], 1
    %12 = vsyncpa %s11, 0
    %13 = vsyncpa [#allocation4], 0
    %s14 = scalar_lea.sflag [#allocation4], 1
    %15 = vsyncpa %s14, 0
    loop: start=0, step=1, limit=4
    $region2: #{tpu_custom_call.1} parent=1 // loop_pre_header
      _
    $region3: #{tpu_custom_call.1} parent=1 // loop_header
      %s17 = sphi 0, %s21
      %p18 = scmp.ge.s32.totalorder %s17, 4
      %s24 = sphi 0, %s36
      %s25 = sphi 0, %s32
      %s26 = sphi 0, %s24
      %s27 = sphi 0, %s25
      %s28 = sphi 0, %s26
      %s29 = sphi 0, %s27
      %s37 = sphi 0, %s37
      %s39 = sphi 0, %s37
      %s40 = sphi 0, %s39
      %s54 = sphi 0, %s40
      %s60 = sphi 0, %s62
      %s63 = sphi 0, %s60
      %s64 = sphi 0, %s63
      %s80 = sphi 0, %s64
      %s88 = sphi 0, %s90
      %s91 = sphi 0, %s88
      %s92 = sphi 0, %s91
      %s108 = sphi 0, %s92
      %s116 = sphi 0, %s118
      %s119 = sphi 0, %s116
      %s120 = sphi 0, %s119
      %s136 = sphi 0, %s120
    $region4: #{tpu_custom_call.1} parent=1 // loop_header_branch
      %20 = sbr.rel (%p18) target = $region8
    $region5: #{tpu_custom_call.1} parent=1 // loop_body
      %s22 = ssub.s32 %s17, 1
      %s23 = ssub.s32 %s17, 2
      %s30 = sadd.s32 1, %s25
      %p31 = scmp.ge.s32.totalorder %s30, 2
      %s32 = scalar_select %p31, 0, %s30
      %s33 = sadd.s32 1, %s24
      %s34 = scalar_select %p31, %s33, %s24
      %p35 = scmp.ge.s32.totalorder %s34, 1
      %s36 = scalar_select %p35, 0, %s34
      %s38 = sadd.s32 %s37, 1
      %p41 = scmp.eq.s32.totalorder %s17, 1
      %p42 = scmp.ne.s32.totalorder %s37, %s39
      %p43 = scmp.eq.s32.totalorder %s17, 0
      %p44 = por %p42, %p43
      %p45 = scmp.ne.s32.totalorder %s37, %s39
      %p46 = scmp.eq.s32.totalorder %s22, 1
      %p47 = por %p45, %p46
      %p48 = scmp.ne.s32.totalorder %s39, %s40
      %p49 = scmp.eq.s32.totalorder %s22, 0
      %p50 = por %p48, %p49
      %p51 = scmp.ne.s32.totalorder %s39, %s40
      %p52 = scmp.eq.s32.totalorder %s23, 1
      %p53 = por %p51, %p52
      %p55 = scmp.ne.s32.totalorder %s40, %s54
      %p56 = scmp.eq.s32.totalorder %s23, 0
      %p57 = por %p55, %p56
      %s58 = ssub.s32 %s24, %s36
      %p59 = scmp.eq.s32.totalorder %s58, 0
      %s61 = sadd.s32 %s60, 1
      %s62 = scalar_select %p59, %s60, %s61
      %p65 = pneg %p59
      %p66 = scmp.eq.s32.totalorder %s17, 1
      %p67 = por %p65, %p66
      %p68 = scmp.ne.s32.totalorder %s60, %s63
      %p69 = scmp.eq.s32.totalorder %s17, 0
      %p70 = por %p68, %p69
      %p71 = scmp.ne.s32.totalorder %s60, %s63
      %p72 = scmp.eq.s32.totalorder %s22, 1
      %p73 = por %p71, %p72
      %p74 = scmp.ne.s32.totalorder %s63, %s64
      %p75 = scmp.eq.s32.totalorder %s22, 0
      %p76 = por %p74, %p75
      %p77 = scmp.ne.s32.totalorder %s63, %s64
      %p78 = scmp.eq.s32.totalorder %s23, 1
      %p79 = por %p77, %p78
      %p81 = scmp.ne.s32.totalorder %s64, %s80
      %p82 = scmp.eq.s32.totalorder %s23, 0
      %p83 = por %p81, %p82
      %s84 = ssub.s32 %s25, %s32
      %s85 = ssub.s32 %s24, %s36
      %s86 = sor.u32 %s84, %s85
      %p87 = scmp.eq.s32.totalorder %s86, 0
      %s89 = sadd.s32 %s88, 1
      %s90 = scalar_select %p87, %s88, %s89
      %p93 = pneg %p87
      %p94 = scmp.eq.s32.totalorder %s17, 1
      %p95 = por %p93, %p94
      %p96 = scmp.ne.s32.totalorder %s88, %s91
      %p97 = scmp.eq.s32.totalorder %s17, 0
      %p98 = por %p96, %p97
      %p99 = scmp.ne.s32.totalorder %s88, %s91
      %p100 = scmp.eq.s32.totalorder %s22, 1
      %p101 = por %p99, %p100
      %p102 = scmp.ne.s32.totalorder %s91, %s92
      %p103 = scmp.eq.s32.totalorder %s22, 0
      %p104 = por %p102, %p103
      %p105 = scmp.ne.s32.totalorder %s91, %s92
      %p106 = scmp.eq.s32.totalorder %s23, 1
      %p107 = por %p105, %p106
      %p109 = scmp.ne.s32.totalorder %s92, %s108
      %p110 = scmp.eq.s32.totalorder %s23, 0
      %p111 = por %p109, %p110
      %s112 = ssub.s32 %s25, %s32
      %s113 = ssub.s32 %s24, %s36
      %s114 = sor.u32 %s112, %s113
      %p115 = scmp.eq.s32.totalorder %s114, 0
      %s117 = sadd.s32 %s116, 1
      %s118 = scalar_select %p115, %s116, %s117
      %p121 = pneg %p115
      %p122 = scmp.eq.s32.totalorder %s17, 1
      %p123 = por %p121, %p122
      %p124 = scmp.ne.s32.totalorder %s116, %s119
      %p125 = scmp.eq.s32.totalorder %s17, 0
      %p126 = por %p124, %p125
      %p127 = scmp.ne.s32.totalorder %s116, %s119
      %p128 = scmp.eq.s32.totalorder %s22, 1
      %p129 = por %p127, %p128
      %p130 = scmp.ne.s32.totalorder %s119, %s120
      %p131 = scmp.eq.s32.totalorder %s22, 0
      %p132 = por %p130, %p131
      %p133 = scmp.ne.s32.totalorder %s119, %s120
      %p134 = scmp.eq.s32.totalorder %s23, 1
      %p135 = por %p133, %p134
      %p137 = scmp.ne.s32.totalorder %s120, %s136
      %p138 = scmp.eq.s32.totalorder %s23, 0
      %p139 = por %p137, %p138
      %p140 = scmp.le.s32.totalorder 1, %s17
      %p141 = scmp.lt.s32.totalorder %s17, 3
      %p142 = pnand %p140, %p141
      %p143 = pneg %p142
      // Predicated region
      $region9: #{tpu_custom_call.1} parent=5 // pred_check
        _
      $region10: #{tpu_custom_call.1} parent=5 // pred_check_branch
        %145 = sbr.rel (%p142) target = $region12
      $region11: #{tpu_custom_call.1} parent=5 // pred_region
        %s146 = ssub.s32 %s17, 1
        // Predicated region
        $region13: #{tpu_custom_call.1} parent=11 // pred_check
          %p147 = pneg %p50
        $region14: #{tpu_custom_call.1} parent=11 // pred_check_branch
          %149 = sbr.rel (%p147) target = $region16
        $region15: #{tpu_custom_call.1} parent=11 // pred_region
          %s151 = ssub.s32 32, 32
          %152 = vsyncadd [#allocation5], %s151
          %155 = dma.hbm_to_smem %s0, 32, [#allocation2], [#allocation5]
        $region16: #{tpu_custom_call.1} parent=11 // pred_fallthru
          _
        // Predicated region
        $region17: #{tpu_custom_call.1} parent=11 // pred_check
          %p156 = pneg %p76
        $region18: #{tpu_custom_call.1} parent=11 // pred_check_branch
          %158 = sbr.rel (%p156) target = $region20
        $region19: #{tpu_custom_call.1} parent=11 // pred_region
          %s160 = ssub.s32 512, 512
          %161 = vsyncadd [#allocation3], %s160
          %s162 = smul.addr %s26, 128
          %s163 = scalar_lea.hbm %s1, %s162
          %s164 = sshll.u32 [#allocation6], 4
          %s165 = int_to_ptr.vmem [resolvable:$true] %s164
          %170 = dma.hbm_to_vmem [thread:$0]  %s163, 512, %s165, [#allocation3], 128, 128, 8
        $region20: #{tpu_custom_call.1} parent=11 // pred_fallthru
          _
      $region12: #{tpu_custom_call.1} parent=5 // pred_fallthru
        _
      %p171 = scmp.lt.s32.totalorder %s17, 2
      // Predicated region
      $region21: #{tpu_custom_call.1} parent=5 // pred_check
        %p172 = pneg %p171
      $region22: #{tpu_custom_call.1} parent=5 // pred_check_branch
        %174 = sbr.rel (%p172) target = $region24
      $region23: #{tpu_custom_call.1} parent=5 // pred_region
        // Predicated region
        $region25: #{tpu_custom_call.1} parent=23 // pred_check
          %p175 = pneg %p98
        $region26: #{tpu_custom_call.1} parent=23 // pred_check_branch
          %177 = sbr.rel (%p175) target = $region28
        $region27: #{tpu_custom_call.1} parent=23 // pred_region
          %s178 = sand.u32 %s88, 1
          %s179 = scalar_lea.sflag [#allocation8], %s178
          %s180 = sand.u32 %s88, 1
          %s181 = smul.addr %s180, 32
          %s182 = scalar_lea.vmem [#allocation7], %s181
          %s184 = ssub.s32 512, 512
          %185 = vsyncadd %s179, %s184
          %s186 = smul.addr %s25, 4
          %s187 = sadd.s32 %s24, %s186
          %s188 = smul.addr %s187, 128
          %s189 = scalar_lea.hbm %s2, %s188
          %s190 = sshll.u32 %s182, 4
          %s191 = int_to_ptr.vmem [resolvable:$true] %s190
          %196 = dma.hbm_to_vmem [thread:$0]  %s189, 512, %s191, %s179, 128, 128, 8
        $region28: #{tpu_custom_call.1} parent=23 // pred_fallthru
          _
      $region24: #{tpu_custom_call.1} parent=5 // pred_fallthru
        _
      %p197 = scmp.le.s32.totalorder 1, %s17
      %p198 = scmp.lt.s32.totalorder %s17, 3
      %p199 = pnand %p197, %p198
      %p200 = pneg %p199
      // Predicated region
      $region29: #{tpu_custom_call.1} parent=5 // pred_check
        _
      $region30: #{tpu_custom_call.1} parent=5 // pred_check_branch
        %202 = sbr.rel (%p199) target = $region32
      $region31: #{tpu_custom_call.1} parent=5 // pred_region
        %s203 = ssub.s32 %s17, 1
        // Predicated region
        $region33: #{tpu_custom_call.1} parent=31 // pred_check
          %p204 = pneg %p50
        $region34: #{tpu_custom_call.1} parent=31 // pred_check_branch
          %206 = sbr.rel (%p204) target = $region36
        $region35: #{tpu_custom_call.1} parent=31 // pred_region
          %207 = dma.done [#allocation5], 32
        $region36: #{tpu_custom_call.1} parent=31 // pred_fallthru
          _
        // Predicated region
        $region37: #{tpu_custom_call.1} parent=31 // pred_check
          %p208 = pneg %p76
        $region38: #{tpu_custom_call.1} parent=31 // pred_check_branch
          %210 = sbr.rel (%p208) target = $region40
        $region39: #{tpu_custom_call.1} parent=31 // pred_region
          %211 = dma.done [#allocation3], 512
        $region40: #{tpu_custom_call.1} parent=31 // pred_fallthru
          _
        %s212 = sand.u32 %s91, 1
        %s213 = scalar_lea.sflag [#allocation8], %s212
        %s214 = sand.u32 %s91, 1
        %s215 = smul.addr %s214, 32
        %s216 = scalar_lea.vmem [#allocation7], %s215
        // Predicated region
        $region41: #{tpu_custom_call.1} parent=31 // pred_check
          %p217 = pneg %p104
        $region42: #{tpu_custom_call.1} parent=31 // pred_check_branch
          %219 = sbr.rel (%p217) target = $region44
        $region43: #{tpu_custom_call.1} parent=31 // pred_region
          %220 = dma.done %s213, 512
        $region44: #{tpu_custom_call.1} parent=31 // pred_fallthru
          _
        %221 = sfence
        %p222 = pneg %p50
        %p223 = pneg %p47
        %p224 = pneg %p76
        %p225 = pneg %p73
        %s226 = sand.u32 %s91, 1
        %s227 = scalar_lea.sflag [#allocation8], %s226
        %s228 = sand.u32 %s91, 1
        %s229 = smul.addr %s228, 32
        %s230 = scalar_lea.vmem [#allocation7], %s229
        %p231 = pneg %p104
        %p232 = pneg %p101
        %p233 = pneg %p132
        %p234 = pneg %p129
        %s235 = sand.u32 %s119, 1
        %s236 = scalar_lea.sflag [#allocation4], %s235
        %s237 = sand.u32 %s119, 1
        %s238 = smul.addr %s237, 32
        %s239 = scalar_lea.vmem [#allocation9], %s238
        %s240 = smul.u32 %s27, 128
        %s241 = sld [smem:[#allocation2 + %s240]]
        %s242 = sadd.s32 %s240, 1
        %s243 = sld [smem:[#allocation2 + %s242]]
        %s244 = ssub.f32 %s243, 1.0
        %s245 = ssub.f32 %s241, 1.0
        %v246 = vld [vmem:[#allocation6] sm:$0xff]
        %s247 = scalar_lea.vmem [#allocation6], 8
        %v248 = vld [vmem:[%s247] sm:$0xff]
        %s249 = scalar_lea.vmem [#allocation6], 16
        %v250 = vld [vmem:[%s249] sm:$0xff]
        %s251 = scalar_lea.vmem [#allocation6], 24
        %v252 = vld [vmem:[%s251] sm:$0xff]
        %v253 = vsub.f32 %v250, %v246
        %v254 = vadd.f32 %v253, 1.0
        %v255 = vsub.f32 %v252, %v248
        %v256 = vadd.f32 %v255, 1.0
        %v257 = vmul.f32 %v254, 0.5
        %v258 = vadd.f32 %v246, %v257
        %v259 = vmul.f32 %v256, 0.5
        %v260 = vadd.f32 %v248, %v259
        %v261 = vld [vmem:[%s216] sm:$0xff]
        %s262 = scalar_lea.vmem %s216, 8 [#allocation7]
        %v263 = vld [vmem:[%s262] sm:$0xff]
        %s264 = scalar_lea.vmem %s216, 16 [#allocation7]
        %v265 = vld [vmem:[%s264] sm:$0xff]
        %v266 = vmin.f32 %v265, 4.1351666
        %s267 = scalar_lea.vmem %s216, 24 [#allocation7]
        %v268 = vld [vmem:[%s267] sm:$0xff]
        %v269 = vmin.f32 %v268, 4.1351666
        %v270 = vmul.f32 %v261, %v254
        %v271 = vadd.f32 %v270, %v258
        %v272 = vmul.f32 %v263, %v256
        %v273 = vadd.f32 %v272, %v260
        %v274 = vmul.f32 %v266, 1.442695
        %v275 = vpow.pop %v274
        %v276 = vmul.f32 %v275, %v254
        %v277 = vmul.f32 %v269, 1.442695
        %v278 = vpow.pop %v277
        %v279 = vmul.f32 %v278, %v256
        %v280 = vmul.f32 %v276, 0.5
        %v281 = vsub.f32 %v271, %v280
        %v282 = vmax.f32 %v281, 0.0
        %v283 = vstv %s244
        %v284 = vmin.f32 %v282, %v283
        %285 = vst [vmem:[%s239] sm:$0xff] %v284
        %v286 = vmul.f32 %v279, 0.5
        %v287 = vsub.f32 %v273, %v286
        %v288 = vmax.f32 %v287, 0.0
        %v289 = vstv %s245
        %v290 = vmin.f32 %v288, %v289
        %s291 = scalar_lea.vmem %s239, 8 [#allocation9]
        %292 = vst [vmem:[%s291] sm:$0xff] %v290
        %v293 = vadd.f32 %v271, %v280
        %v294 = vmax.f32 %v293, 0.0
        %v295 = vmin.f32 %v294, %v283
        %s296 = scalar_lea.vmem %s239, 16 [#allocation9]
        %297 = vst [vmem:[%s296] sm:$0xff] %v295
        %v298 = vadd.f32 %v273, %v286
        %v299 = vmax.f32 %v298, 0.0
        %v300 = vmin.f32 %v299, %v289
        %s301 = scalar_lea.vmem %s239, 24 [#allocation9]
        %302 = vst [vmem:[%s301] sm:$0xff] %v300
        %s303 = sand.u32 %s119, 1
        %s304 = scalar_lea.sflag [#allocation4], %s303
        %s305 = sand.u32 %s119, 1
        %s306 = smul.addr %s305, 32
        %s307 = scalar_lea.vmem [#allocation9], %s306
        // Predicated region
        $region45: #{tpu_custom_call.1} parent=31 // pred_check
          %p308 = pneg %p129
        $region46: #{tpu_custom_call.1} parent=31 // pred_check_branch
          %310 = sbr.rel (%p308) target = $region48
        $region47: #{tpu_custom_call.1} parent=31 // pred_region
          %s312 = ssub.s32 512, 512
          %313 = vsyncadd %s304, %s312
          %s314 = smul.addr %s27, 4
          %s315 = sadd.s32 %s26, %s314
          %s316 = smul.addr %s315, 128
          %s317 = scalar_lea.hbm %s3, %s316
          %s318 = sshll.u32 %s307, 4
          %s319 = int_to_ptr.vmem [resolvable:$true] %s318
          %324 = dma.vmem_to_hbm [thread:$0]  %s319, 512, %s317, %s304, 128, 128, 8
        $region48: #{tpu_custom_call.1} parent=31 // pred_fallthru
          _
      $region32: #{tpu_custom_call.1} parent=5 // pred_fallthru
        _
      %p325 = scmp.le.s32.totalorder 2, %s17
      // Predicated region
      $region49: #{tpu_custom_call.1} parent=5 // pred_check
        %p326 = pneg %p325
      $region50: #{tpu_custom_call.1} parent=5 // pred_check_branch
        %328 = sbr.rel (%p326) target = $region52
      $region51: #{tpu_custom_call.1} parent=5 // pred_region
        %s329 = ssub.s32 %s17, 2
        // Predicated region
        $region53: #{tpu_custom_call.1} parent=51 // pred_check
          %p330 = pneg %p135
        $region54: #{tpu_custom_call.1} parent=51 // pred_check_branch
          %332 = sbr.rel (%p330) target = $region56
        $region55: #{tpu_custom_call.1} parent=51 // pred_region
          %s333 = sand.u32 %s120, 1
          %s334 = scalar_lea.sflag [#allocation4], %s333
          %s335 = sand.u32 %s120, 1
          %s336 = smul.addr %s335, 32
          %s337 = scalar_lea.vmem [#allocation9], %s336
          %338 = dma.done %s334, 512
        $region56: #{tpu_custom_call.1} parent=51 // pred_fallthru
          _
      $region52: #{tpu_custom_call.1} parent=5 // pred_fallthru
        _
    $region6: #{tpu_custom_call.1} parent=1 // loop_footer
      %s21 = sadd.s32 1, %s17
    $region7: #{tpu_custom_call.1} parent=1 // loop_footer_branch
      %16 = sbr.rel target = $region3
    $region8: #{tpu_custom_call.1} parent=1 // loop_exit
      _
    %339 = vsyncpa [#allocation3], 1
    %s340 = scalar_lea.sflag [#allocation3], 1
    %341 = vsyncpa %s340, 1
    %342 = vsyncpa [#allocation8], 1
    %s343 = scalar_lea.sflag [#allocation8], 1
    %344 = vsyncpa %s343, 1
    %345 = vsyncpa [#allocation4], 1
    %s346 = scalar_lea.sflag [#allocation4], 1
    %347 = vsyncpa %s346, 1
    %348 = vsyncpa [#allocation5], 1
    %s349 = scalar_lea.sflag [#allocation5], 1
    %350 = vsyncpa %s349, 1

</llo_original>
